<compile_context>
chip_gen: v7x
topology: tpu7x:2x2x1
jax: 0.10.0
libtpu: 0.0.40
codegen_flags: <defaults>
</compile_context>

<pallas_src>
import functools

import numpy as np
import jax
import jax.numpy as jnp
from jax.experimental import pallas as pl
from jax.experimental.pallas import tpu as pltpu


# ----------------------------------------------------------------------------
# Pallas kernel: fused 4-layer MLP on a (TB, 100) batch tile.
# (Symmetrizations are already folded into w4/b4 by the wrapper.)
# ----------------------------------------------------------------------------
def band_gen_kernel(x_ref, w1_ref, b1_ref, w2_ref, b2_ref,
                    w3_ref, b3_ref, w4_ref, b4_ref, out_ref):
    cdt = w1_ref.dtype                            # MXU (matmul) dtype
    x = x_ref[...].astype(cdt)                    # (TB, 100), cast in-kernel

    # encoder: Linear(100->32) + ReLU, Linear(32->latent) + ReLU
    h = jnp.dot(x, w1_ref[...], preferred_element_type=jnp.float32) + b1_ref[...]
    h = jnp.maximum(h, 0.0)
    z = jnp.dot(h.astype(cdt), w2_ref[...],
                preferred_element_type=jnp.float32) + b2_ref[...]
    z = jnp.maximum(z, 0.0)

    # decoder: Linear(latent->32) + ReLU, Linear(32->100, symmetrization folded)
    d = jnp.dot(z.astype(cdt), w3_ref[...],
                preferred_element_type=jnp.float32) + b3_ref[...]
    d = jnp.maximum(d, 0.0)
    y = jnp.dot(d.astype(cdt), w4_ref[...],
                preferred_element_type=jnp.float32) + b4_ref[...]

    out_ref[...] = y.astype(out_ref.dtype)


# ----------------------------------------------------------------------------
# Host-side constants / helpers
# ----------------------------------------------------------------------------
def _round_up(n, m):
    return ((n + m - 1) // m) * m


@functools.lru_cache(maxsize=None)
def _sym_fold_matrix_np():
    """0.25*(I+P_t)@(I+P_a) as a (100, 100) matrix.  Built once with numpy."""
    idx = np.arange(100)
    i, j = idx // 10, idx % 10
    perm_t = 10 * j + i                  # transpose:       out[i,j] = in[j,i]
    perm_a = 10 * (9 - j) + (9 - i)      # anti-transpose:  out[i,j] = in[9-j,9-i]
    p_t = np.zeros((100, 100), np.float32)
    p_t[perm_t, idx] = 1.0
    p_a = np.zeros((100, 100), np.float32)
    p_a[perm_a, idx] = 1.0
    eye = np.eye(100, dtype=np.float32)
    return (0.25 * (eye + p_t) @ p_a + 0.25 * (eye + p_t)).astype(np.float32)


def _choose_tile(B, block_b, min_grid_steps):
    """Batch tile: multiple of 16, <= block_b (capped 8192), and small enough
    that large batches get >= min_grid_steps grid steps (megacore + pipelining)."""
    block_b = min(int(block_b), 8192)
    bp16 = _round_up(B, 16)
    cap_for_steps = max(16, (bp16 // max(min_grid_steps, 1)) // 16 * 16)
    tb = max(16, min(block_b, cap_for_steps))
    return tb


# ----------------------------------------------------------------------------
# Wrapper
# ----------------------------------------------------------------------------
def band_generator_flat(x, params, *, compute_dtype=jnp.bfloat16,
                        out_dtype=jnp.float32, block_b=4096, min_grid_steps=8):
    """x: (B, 1, 10, 10) float32 NCHW.  Returns (B, 1, 10, 10) in out_dtype."""
    B = x.shape[0]
    x_flat = jnp.asarray(x, jnp.float32).reshape(B, 100)

    w1, b1, w2, b2, w3, b3, w4, b4 = params
    latent = w2.shape[1]

    # Fold both symmetrizations into w4/b4 (in f32, before any bf16 cast).
    S = jnp.asarray(_sym_fold_matrix_np())             # (100, 100) const
    w4f = jnp.dot(w4, S)                                # (32, 100)
    b4f = jnp.dot(b4, S)                                # (1, 100)

    # Batch tiling (TB multiple of 16 covers bf16 sublane packing).
    tb = _choose_tile(B, block_b, min_grid_steps)
    Bp = _round_up(B, tb)
    x_in = x_flat if Bp == B else jnp.pad(x_flat, ((0, Bp - B), (0, 0)))

    cdt = compute_dtype
    w1c, w2c, w3c, w4c = (w.astype(cdt) for w in (w1, w2, w3, w4f))
    b1f, b2f, b3f, b4ff = (b.astype(jnp.float32) for b in (b1, b2, b3, b4f))

    def full_spec(shape):
        n = len(shape)
        return pl.BlockSpec(shape, lambda i, _n=n: (0,) * _n)

    # Explicit VMEM budget: double-buffered in/out tiles (lane-padded to 128)
    # plus weights/intermediates headroom.  Stays well under v7x's 64 MiB.
    out_isize = jnp.dtype(out_dtype).itemsize
    tile_in_bytes = tb * 128 * 4
    tile_out_bytes = tb * 128 * out_isize
    vmem_bytes = int(min(2 * (tile_in_bytes + tile_out_bytes) + (16 << 20),
                         56 << 20))

    flops_per_row = 2 * (100 * 32 + 32 * latent + latent * 32 + 32 * 100)
    bytes_per_row = 100 * 4 + 100 * out_isize
    cost = pl.CostEstimate(flops=int(Bp * flops_per_row),
                           transcendentals=0,
                           bytes_accessed=int(Bp * bytes_per_row))

    out = pl.pallas_call(
        band_gen_kernel,
        out_shape=jax.ShapeDtypeStruct((Bp, 100), out_dtype),
        grid_spec=pltpu.PrefetchScalarGridSpec(
            num_scalar_prefetch=0,
            grid=(Bp // tb,),
            in_specs=[
                pl.BlockSpec((tb, 100), lambda i: (i, 0)),        # x tile (f32)
                full_spec((100, 32)),    full_spec((1, 32)),      # w1, b1
                full_spec((32, latent)), full_spec((1, latent)),  # w2, b2
                full_spec((latent, 32)), full_spec((1, 32)),      # w3, b3
                full_spec((32, 100)),    full_spec((1, 100)),     # w4', b4'
            ],
            out_specs=pl.BlockSpec((tb, 100), lambda i: (i, 0)),
        ),
        compiler_params=pltpu.CompilerParams(
            dimension_semantics=("parallel",),
            vmem_limit_bytes=vmem_bytes),
        cost_estimate=cost,
    )(x_in, w1c, b1f, w2c, b2f, w3c, b3f, w4c, b4ff)

    if Bp != B:
        out = out[:B]
    return out.reshape(B, 1, 10, 10)


def init_params(key, latent_dim=4):
    """Deterministic PyTorch-style uniform(-1/sqrt(fan_in), 1/sqrt(fan_in)) init."""
    def linear(key, fan_in, fan_out):
        kw, kb = jax.random.split(key)
        bound = 1.0 / jnp.sqrt(fan_in)
        w = jax.random.uniform(kw, (fan_in, fan_out), jnp.float32, -bound, bound)
        b = jax.random.uniform(kb, (1, fan_out), jnp.float32, -bound, bound)
        return w, b

    k1, k2, k3, k4 = jax.random.split(key, 4)
    w1, b1 = linear(k1, 100, 32)
    w2, b2 = linear(k2, 32, latent_dim)
    w3, b3 = linear(k3, latent_dim, 32)
    w4, b4 = linear(k4, 32, 100)
    return (w1, b1, w2, b2, w3, b3, w4, b4)


# ----------------------------------------------------------------------------
# Pure-JAX reference (mirrors the PyTorch forward exactly) for validation.
# ----------------------------------------------------------------------------
def reference_forward(x, params):
    (w1, b1, w2, b2, w3, b3, w4, b4) = params
    B = x.shape[0]
    h = jnp.maximum(x.reshape(B, 100) @ w1 + b1, 0.0)
    z = jnp.maximum(h @ w2 + b2, 0.0)
    d = jnp.maximum(z @ w3 + b3, 0.0)
    y = (d @ w4 + b4).reshape(B, 1, 10, 10)
    y = (y + jnp.swapaxes(y, 2, 3)) * 0.5
    anti = jnp.swapaxes(y[..., ::-1, ::-1], 2, 3)   # y[9-j, 9-i]
    y = (y + anti) * 0.5
    return y


if __name__ == "__main__":
    key = jax.random.PRNGKey(0)
    k_param, k_x1, k_x2 = jax.random.split(key, 3)

    latent_dim = 4
    params = init_params(k_param, latent_dim=latent_dim)

    # Primary small test: batch=2, NCHW input (B, 1, 10, 10).
    x = jax.random.normal(k_x1, (2, 1, 10, 10), jnp.float32)
    y_ref = reference_forward(x, params)

    # f32 compute path: must match the reference closely.
    y32 = jax.block_until_ready(
        band_generator_flat(x, params, compute_dtype=jnp.float32))
    assert y32.shape == (2, 1, 10, 10)
    assert jnp.max(jnp.abs(y32 - y_ref)) < 5e-5

    # bf16-matmul path (MXU-native, in-kernel cast): looser tolerance.
    ybf = jax.block_until_ready(
        band_generator_flat(x, params, compute_dtype=jnp.bfloat16))
    assert jnp.max(jnp.abs(ybf - y_ref)) < 3e-2

    # Multi-tile grid + batch-padding path (B=50 with 16-row tiles -> 4 steps).
    xb = jax.random.normal(k_x2, (50, 1, 10, 10), jnp.float32)
    yb = jax.block_until_ready(
        band_generator_flat(xb, params, compute_dtype=jnp.float32, block_b=16))
    assert jnp.max(jnp.abs(yb - reference_forward(xb, params))) < 5e-5

    # Default tiling policy on a moderate batch (exercises >=2 grid steps).
    xc = jax.random.normal(k_x2, (200, 1, 10, 10), jnp.float32)
    yc = jax.block_until_ready(
        band_generator_flat(xc, params, compute_dtype=jnp.bfloat16))
    assert jnp.max(jnp.abs(yc - reference_forward(xc, params))) < 3e-2

    print("KERNEL_OK")
</pallas_src>

<mosaic_0001>
module attributes {stable_mosaic.version = 11 : i64} {
  func.func @band_gen_kernel(%arg0: i32, %arg1: memref<16x100xf32, #tpu.memory_space<vmem>>, %arg2: memref<100x32xf32, #tpu.memory_space<vmem>>, %arg3: memref<1x32xf32, #tpu.memory_space<vmem>>, %arg4: memref<32x4xf32, #tpu.memory_space<vmem>>, %arg5: memref<1x4xf32, #tpu.memory_space<vmem>>, %arg6: memref<4x32xf32, #tpu.memory_space<vmem>>, %arg7: memref<1x32xf32, #tpu.memory_space<vmem>>, %arg8: memref<32x100xf32, #tpu.memory_space<vmem>>, %arg9: memref<1x100xf32, #tpu.memory_space<vmem>>, %arg10: memref<16x100xf32, #tpu.memory_space<vmem>>) attributes {dimension_semantics = [#tpu.dimension_semantics<parallel>], iteration_bounds = array<i64: 1>, scalar_prefetch = 0 : i64, scratch_operands = 0 : i64, tpu.core_type = #tpu.core_type<tc>, window_params = [{transform_indices = @transform_0, window_bounds = array<i64: 16, 100>}, {pipeline_mode = #tpu.pipeline_mode<synchronous>, transform_indices = @transform_1, window_bounds = array<i64: 100, 32>}, {pipeline_mode = #tpu.pipeline_mode<synchronous>, transform_indices = @transform_2, window_bounds = array<i64: 1, 32>}, {pipeline_mode = #tpu.pipeline_mode<synchronous>, transform_indices = @transform_3, window_bounds = array<i64: 32, 4>}, {pipeline_mode = #tpu.pipeline_mode<synchronous>, transform_indices = @transform_4, window_bounds = array<i64: 1, 4>}, {pipeline_mode = #tpu.pipeline_mode<synchronous>, transform_indices = @transform_5, window_bounds = array<i64: 4, 32>}, {pipeline_mode = #tpu.pipeline_mode<synchronous>, transform_indices = @transform_6, window_bounds = array<i64: 1, 32>}, {pipeline_mode = #tpu.pipeline_mode<synchronous>, transform_indices = @transform_7, window_bounds = array<i64: 32, 100>}, {pipeline_mode = #tpu.pipeline_mode<synchronous>, transform_indices = @transform_8, window_bounds = array<i64: 1, 100>}, {transform_indices = @transform_9, window_bounds = array<i64: 16, 100>}]} {
    %c0 = arith.constant 0 : index
    %c0_0 = arith.constant 0 : index
    %0 = vector.load %arg1[%c0, %c0_0] : memref<16x100xf32, #tpu.memory_space<vmem>>, vector<16x100xf32>
    %c0_1 = arith.constant 0 : index
    %c0_2 = arith.constant 0 : index
    %1 = vector.load %arg2[%c0_1, %c0_2] : memref<100x32xf32, #tpu.memory_space<vmem>>, vector<100x32xf32>
    %cst = arith.constant dense<0.000000e+00> : vector<16x32xf32>
    %2 = tpu.matmul %0, %1, %cst {dimension_numbers = #tpu.dot_dimension_numbers<[1], [0], [0], [1], [0, 0, 1, 1], [], []>} : vector<16x100xf32>, vector<100x32xf32>, vector<16x32xf32> -> vector<16x32xf32>
    %c0_3 = arith.constant 0 : index
    %c0_4 = arith.constant 0 : index
    %3 = vector.load %arg3[%c0_3, %c0_4] : memref<1x32xf32, #tpu.memory_space<vmem>>, vector<1x32xf32>
    %4 = vector.broadcast %3 : vector<1x32xf32> to vector<16x32xf32>
    %5 = arith.addf %2, %4 : vector<16x32xf32>
    %cst_5 = arith.constant 0.000000e+00 : f32
    %6 = vector.broadcast %cst_5 : f32 to vector<16x32xf32>
    %7 = arith.maximumf %5, %6 : vector<16x32xf32>
    %c0_6 = arith.constant 0 : index
    %c0_7 = arith.constant 0 : index
    %8 = vector.load %arg4[%c0_6, %c0_7] : memref<32x4xf32, #tpu.memory_space<vmem>>, vector<32x4xf32>
    %cst_8 = arith.constant dense<0.000000e+00> : vector<16x4xf32>
    %9 = tpu.matmul %7, %8, %cst_8 {dimension_numbers = #tpu.dot_dimension_numbers<[1], [0], [0], [1], [0, 0, 1, 1], [], []>} : vector<16x32xf32>, vector<32x4xf32>, vector<16x4xf32> -> vector<16x4xf32>
    %c0_9 = arith.constant 0 : index
    %c0_10 = arith.constant 0 : index
    %10 = vector.load %arg5[%c0_9, %c0_10] : memref<1x4xf32, #tpu.memory_space<vmem>>, vector<1x4xf32>
    %11 = vector.broadcast %10 : vector<1x4xf32> to vector<16x4xf32>
    %12 = arith.addf %9, %11 : vector<16x4xf32>
    %cst_11 = arith.constant 0.000000e+00 : f32
    %13 = vector.broadcast %cst_11 : f32 to vector<16x4xf32>
    %14 = arith.maximumf %12, %13 : vector<16x4xf32>
    %c0_12 = arith.constant 0 : index
    %c0_13 = arith.constant 0 : index
    %15 = vector.load %arg6[%c0_12, %c0_13] : memref<4x32xf32, #tpu.memory_space<vmem>>, vector<4x32xf32>
    %cst_14 = arith.constant dense<0.000000e+00> : vector<16x32xf32>
    %16 = tpu.matmul %14, %15, %cst_14 {dimension_numbers = #tpu.dot_dimension_numbers<[1], [0], [0], [1], [0, 0, 1, 1], [], []>} : vector<16x4xf32>, vector<4x32xf32>, vector<16x32xf32> -> vector<16x32xf32>
    %c0_15 = arith.constant 0 : index
    %c0_16 = arith.constant 0 : index
    %17 = vector.load %arg7[%c0_15, %c0_16] : memref<1x32xf32, #tpu.memory_space<vmem>>, vector<1x32xf32>
    %18 = vector.broadcast %17 : vector<1x32xf32> to vector<16x32xf32>
    %19 = arith.addf %16, %18 : vector<16x32xf32>
    %cst_17 = arith.constant 0.000000e+00 : f32
    %20 = vector.broadcast %cst_17 : f32 to vector<16x32xf32>
    %21 = arith.maximumf %19, %20 : vector<16x32xf32>
    %c0_18 = arith.constant 0 : index
    %c0_19 = arith.constant 0 : index
    %22 = vector.load %arg8[%c0_18, %c0_19] : memref<32x100xf32, #tpu.memory_space<vmem>>, vector<32x100xf32>
    %cst_20 = arith.constant dense<0.000000e+00> : vector<16x100xf32>
    %23 = tpu.matmul %21, %22, %cst_20 {dimension_numbers = #tpu.dot_dimension_numbers<[1], [0], [0], [1], [0, 0, 1, 1], [], []>} : vector<16x32xf32>, vector<32x100xf32>, vector<16x100xf32> -> vector<16x100xf32>
    %c0_21 = arith.constant 0 : index
    %c0_22 = arith.constant 0 : index
    %24 = vector.load %arg9[%c0_21, %c0_22] : memref<1x100xf32, #tpu.memory_space<vmem>>, vector<1x100xf32>
    %25 = vector.broadcast %24 : vector<1x100xf32> to vector<16x100xf32>
    %26 = arith.addf %23, %25 : vector<16x100xf32>
    %c0_23 = arith.constant 0 : index
    %c0_24 = arith.constant 0 : index
    %27 = vector.load %arg10[%c0_23, %c0_24] : memref<16x100xf32, #tpu.memory_space<vmem>>, vector<16x100xf32>
    tpu.vector_store %arg10[%c0_23, %c0_24], %26 {strides = array<i32>} : memref<16x100xf32, #tpu.memory_space<vmem>>, vector<16x100xf32>,
    return
  }
  func.func @transform_0(%arg0: i32) -> (i32, i32) {
    %c0_i32 = arith.constant 0 : i32
    %c0_i32_0 = arith.constant 0 : i32
    return %arg0, %c0_i32 : i32, i32
  }
  func.func @transform_1(%arg0: i32) -> (i32, i32) {
    %c0_i32 = arith.constant 0 : i32
    %c0_i32_0 = arith.constant 0 : i32
    %c0_i32_1 = arith.constant 0 : i32
    return %c0_i32, %c0_i32_0 : i32, i32
  }
  func.func @transform_2(%arg0: i32) -> (i32, i32) {
    %c0_i32 = arith.constant 0 : i32
    %c0_i32_0 = arith.constant 0 : i32
    %c0_i32_1 = arith.constant 0 : i32
    return %c0_i32, %c0_i32_0 : i32, i32
  }
  func.func @transform_3(%arg0: i32) -> (i32, i32) {
    %c0_i32 = arith.constant 0 : i32
    %c0_i32_0 = arith.constant 0 : i32
    %c0_i32_1 = arith.constant 0 : i32
    return %c0_i32, %c0_i32_0 : i32, i32
  }
  func.func @transform_4(%arg0: i32) -> (i32, i32) {
    %c0_i32 = arith.constant 0 : i32
    %c0_i32_0 = arith.constant 0 : i32
    %c0_i32_1 = arith.constant 0 : i32
    return %c0_i32, %c0_i32_0 : i32, i32
  }
  func.func @transform_5(%arg0: i32) -> (i32, i32) {
    %c0_i32 = arith.constant 0 : i32
    %c0_i32_0 = arith.constant 0 : i32
    %c0_i32_1 = arith.constant 0 : i32
    return %c0_i32, %c0_i32_0 : i32, i32
  }
  func.func @transform_6(%arg0: i32) -> (i32, i32) {
    %c0_i32 = arith.constant 0 : i32
    %c0_i32_0 = arith.constant 0 : i32
    %c0_i32_1 = arith.constant 0 : i32
    return %c0_i32, %c0_i32_0 : i32, i32
  }
  func.func @transform_7(%arg0: i32) -> (i32, i32) {
    %c0_i32 = arith.constant 0 : i32
    %c0_i32_0 = arith.constant 0 : i32
    %c0_i32_1 = arith.constant 0 : i32
    return %c0_i32, %c0_i32_0 : i32, i32
  }
  func.func @transform_8(%arg0: i32) -> (i32, i32) {
    %c0_i32 = arith.constant 0 : i32
    %c0_i32_0 = arith.constant 0 : i32
    %c0_i32_1 = arith.constant 0 : i32
    return %c0_i32, %c0_i32_0 : i32, i32
  }
  func.func @transform_9(%arg0: i32) -> (i32, i32) {
    %c0_i32 = arith.constant 0 : i32
    %c0_i32_0 = arith.constant 0 : i32
    return %arg0, %c0_i32 : i32, i32
  }
}

</mosaic_0001>

<llo_original>
// kernel: tpu_custom_call.1
$region0: #{tpu_custom_call.1}
  #allocation0 [shape = 'u32[]', space=smem, size = 0x4, offset = 0x4, fixed_abs, tag = 'smem constant byte address 0x4 - core index']
  #allocation1 [shape = 'u32[144,128]{1,0:T(1,128)}', space=vmem, size = 0x12000, scoped, tag = 'internal scratch']
  %s0 = inlined_call_operand.vmem [shape: f32[16,100], index: 0, kind: input, shape index: {}]
  %s1 = inlined_call_operand.vmem [shape: f32[100,32], index: 1, kind: input, shape index: {}]
  %s2 = inlined_call_operand.vmem [shape: f32[1,32], index: 2, kind: input, shape index: {}]
  %s3 = inlined_call_operand.vmem [shape: f32[32,4], index: 3, kind: input, shape index: {}]
  %s4 = inlined_call_operand.vmem [shape: f32[1,4], index: 4, kind: input, shape index: {}]
  %s5 = inlined_call_operand.vmem [shape: f32[4,32], index: 5, kind: input, shape index: {}]
  %s6 = inlined_call_operand.vmem [shape: f32[1,32], index: 6, kind: input, shape index: {}]
  %s7 = inlined_call_operand.vmem [shape: f32[32,100], index: 7, kind: input, shape index: {}]
  %s8 = inlined_call_operand.vmem [shape: f32[1,100], index: 8, kind: input, shape index: {}]
  %s9 = inlined_call_operand.hbm [shape: f32[16,100], index: 9, kind: output, shape index: {}]
  %s10 = sld [smem:[#allocation0]]
  $region46: #{tpu_custom_call.1} parent=0
    _
  %s12 = ssub.s32 1, %s10
  %s13 = scalar_select 0, %s12, %s10
  $region1: #{tpu_custom_call.1} parent=0
    #allocation2 [shape = 'u8[8192]{0}', space=vmem, size = 0x2000, scoped, tag = 'output window, operand 0, single buffered']
    #allocation3 [shape = 's32[1]{0}', space=sflag, size = 0x4, scoped, tag = 'scoped memory for tpu_custom_call.1']
    %14 = vsyncpa [#allocation3], 0
    // Predicated region
    $region2: #{tpu_custom_call.1} parent=1 // pred_check
      _
    $region3: #{tpu_custom_call.1} parent=1 // pred_check_branch
      %16 = sbr.rel (0) target = $region5
    $region4: #{tpu_custom_call.1} parent=1 // pred_region
      _
    $region5: #{tpu_custom_call.1} parent=1 // pred_fallthru
      _
    // Predicated region
    $region6: #{tpu_custom_call.1} parent=1 // pred_check
      _
    $region7: #{tpu_custom_call.1} parent=1 // pred_check_branch
      %18 = sbr.rel (0) target = $region9
    $region8: #{tpu_custom_call.1} parent=1 // pred_region
      _
    $region9: #{tpu_custom_call.1} parent=1 // pred_fallthru
      _
    // Predicated region
    $region10: #{tpu_custom_call.1} parent=1 // pred_check
      _
    $region11: #{tpu_custom_call.1} parent=1 // pred_check_branch
      %20 = sbr.rel (0) target = $region13
    $region12: #{tpu_custom_call.1} parent=1 // pred_region
      _
    $region13: #{tpu_custom_call.1} parent=1 // pred_fallthru
      _
    // Predicated region
    $region14: #{tpu_custom_call.1} parent=1 // pred_check
      _
    $region15: #{tpu_custom_call.1} parent=1 // pred_check_branch
      %22 = sbr.rel (0) target = $region17
    $region16: #{tpu_custom_call.1} parent=1 // pred_region
      _
    $region17: #{tpu_custom_call.1} parent=1 // pred_fallthru
      _
    // Predicated region
    $region18: #{tpu_custom_call.1} parent=1 // pred_check
      _
    $region19: #{tpu_custom_call.1} parent=1 // pred_check_branch
      %24 = sbr.rel (0) target = $region21
    $region20: #{tpu_custom_call.1} parent=1 // pred_region
      _
    $region21: #{tpu_custom_call.1} parent=1 // pred_fallthru
      _
    // Predicated region
    $region22: #{tpu_custom_call.1} parent=1 // pred_check
      _
    $region23: #{tpu_custom_call.1} parent=1 // pred_check_branch
      %26 = sbr.rel (0) target = $region25
    $region24: #{tpu_custom_call.1} parent=1 // pred_region
      _
    $region25: #{tpu_custom_call.1} parent=1 // pred_fallthru
      _
    // Predicated region
    $region26: #{tpu_custom_call.1} parent=1 // pred_check
      _
    $region27: #{tpu_custom_call.1} parent=1 // pred_check_branch
      %28 = sbr.rel (0) target = $region29
    $region28: #{tpu_custom_call.1} parent=1 // pred_region
      _
    $region29: #{tpu_custom_call.1} parent=1 // pred_fallthru
      _
    // Predicated region
    $region30: #{tpu_custom_call.1} parent=1 // pred_check
      _
    $region31: #{tpu_custom_call.1} parent=1 // pred_check_branch
      %30 = sbr.rel (0) target = $region33
    $region32: #{tpu_custom_call.1} parent=1 // pred_region
      _
    $region33: #{tpu_custom_call.1} parent=1 // pred_fallthru
      _
    // Predicated region
    $region34: #{tpu_custom_call.1} parent=1 // pred_check
      _
    $region35: #{tpu_custom_call.1} parent=1 // pred_check_branch
      %32 = sbr.rel (0) target = $region37
    $region36: #{tpu_custom_call.1} parent=1 // pred_region
      _
    $region37: #{tpu_custom_call.1} parent=1 // pred_fallthru
      _
    %v33 = vld [vmem:[%s0] sm:$0xff]
    %v34 = vld [vmem:[%s0 + $0x8] sm:$0xff]
    %v35 = vld [vmem:[%s1] sm:$0xff]
    %v36 = vld [vmem:[%s1 + $0x8] sm:$0xff]
    %v37 = vld [vmem:[%s1 + $0x10] sm:$0xff]
    %v38 = vld [vmem:[%s1 + $0x18] sm:$0xff]
    %v39 = vld [vmem:[%s1 + $0x20] sm:$0xff]
    %v40 = vld [vmem:[%s1 + $0x28] sm:$0xff]
    %v41 = vld [vmem:[%s1 + $0x30] sm:$0xff]
    %v42 = vld [vmem:[%s1 + $0x38] sm:$0xff]
    %v43 = vld [vmem:[%s1 + $0x40] sm:$0xff]
    %v44 = vld [vmem:[%s1 + $0x48] sm:$0xff]
    %v45 = vld [vmem:[%s1 + $0x50] sm:$0xff]
    %v46 = vld [vmem:[%s1 + $0x58] sm:$0xff]
    %v47 = vld [vmem:[%s1 + $0x60] sm:$0xf]
    %v48 = vld [vmem:[%s2] sm:$0x1]
    %v50 = vlaneseq
    %v51 = vshrl.u32 %v50, 7
    %v52 = vsub.s32 0, %v51
    %v53 = vrot.slane %v48, %v52
    %vm55 = vcmask 818176
    %v57 = vsel %vm55, %v33, 0
    %v60 = vsel %vm55, %v34, 0
    %vm62 = vcmask 1043456
    %v64 = vsel %vm62, %v47, 0
    %66 = vmatprep.subr.mxu0 0.0
    %67 = vmatpush1.msra.mxu0 %v35
    %68 = vmatprep.subr.mxu0 0.0
    %69 = vmatpush1.msra.mxu0 %v36
    %70 = vmatprep.subr.mxu0 0.0
    %71 = vmatpush1.msra.mxu0 %v37
    %72 = vmatprep.subr.mxu0 0.0
    %73 = vmatpush1.msra.mxu0 %v38
    %74 = vmatprep.subr.mxu0 0.0
    %75 = vmatpush1.msra.mxu0 %v39
    %76 = vmatprep.subr.mxu0 0.0
    %77 = vmatpush1.msra.mxu0 %v40
    %78 = vmatprep.subr.mxu0 0.0
    %79 = vmatpush1.msra.mxu0 %v41
    %80 = vmatprep.subr.mxu0 0.0
    %81 = vmatpush1.msra.mxu0 %v42
    %82 = vmatprep.subr.mxu0 0.0
    %83 = vmatpush1.msra.mxu0 %v43
    %84 = vmatprep.subr.mxu0 0.0
    %85 = vmatpush1.msra.mxu0 %v44
    %86 = vmatprep.subr.mxu0 0.0
    %87 = vmatpush1.msra.mxu0 %v45
    %88 = vmatprep.subr.mxu0 0.0
    %89 = vmatpush1.msra.mxu0 %v46
    %90 = vmatprep.subr.mxu0 0.0
    %91 = vmatpush1.msra.mxu0 %v64
    %92 = vmatprep.subr.mxu0 0.0
    %93 = vmatpush1.msra.mxu0 0.0
    %94 = vmatprep.subr.mxu0 0.0
    %95 = vmatpush1.msra.mxu0 0.0
    %96 = vmatprep.subr.mxu0 0.0
    %97 = vmatpush1.msra.mxu0 0.0
    %98 = vmatprep.subr.mxu0 0.0
    %99 = vmatpush1.msra.mxu0 0.0
    %100 = vmatprep.subr.mxu0 0.0
    %101 = vmatpush1.msra.mxu0 0.0
    %102 = vmatprep.subr.mxu0 0.0
    %103 = vmatpush1.msra.mxu0 0.0
    %104 = vmatprep.subr.mxu0 0.0
    %105 = vmatpush1.msra.mxu0 0.0
    %106 = vmatprep.subr.mxu0 0.0
    %107 = vmatpush1.msra.mxu0 0.0
    %108 = vmatprep.subr.mxu0 0.0
    %109 = vmatpush1.msra.mxu0 0.0
    %110 = vmatprep.subr.mxu0 0.0
    %111 = vmatpush1.msra.mxu0 0.0
    %112 = vmatprep.subr.mxu0 0.0
    %113 = vmatpush1.msra.mxu0 0.0
    %114 = vmatprep.subr.mxu0 0.0
    %115 = vmatpush1.msra.mxu0 0.0
    %116 = vmatprep.subr.mxu0 0.0
    %117 = vmatpush1.msra.mxu0 0.0
    %118 = vmatprep.subr.mxu0 0.0
    %119 = vmatpush1.msra.mxu0 0.0
    %120 = vmatprep.subr.mxu0 0.0
    %121 = vmatpush1.msra.mxu0 0.0
    %122 = vmatprep.subr.mxu0 0.0
    %123 = vmatpush1.msra.mxu0 0.0
    %124 = vmatprep.subr.mxu0 0.0
    %125 = vmatpush1.msra.mxu0 0.0
    %126 = vmatprep.subr.mxu0 0.0
    %127 = vmatpush1.msra.mxu0 0.0
    %128 = vmatprep.subr.mxu0 0.0
    %129 = vmatpush1.msra.mxu0 0.0
    %130 = vmatprep.mubr.f32.mxu0 0.0
    %131 = vmatmul.mubr.f32.gmra.mrb[0].mxu0 %v57
    %v132 = vpop.f32.mrb[0].mxu0
    %v133 = vadd.f32 %v53, %v132
    %v134 = vpop.f32.mrb[0].mxu0
    %135 = vmatprep.mubr.f32.mxu0 0.0
    %136 = vmatmul.mubr.f32.gmra.mrb[0].mxu0 %v60
    %v137 = vpop.f32.mrb[0].mxu0
    %v138 = vadd.f32 %v53, %v137
    %v139 = vpop.f32.mrb[0].mxu0
    %140 = vdwg.mxu0
    %v141 = vmax.f32 %v133, 0.0
    %v142 = vmax.f32 %v138, 0.0
    %v143 = vld [vmem:[%s3] sm:$0xff]
    %v144 = vld [vmem:[%s3 + $0x8] sm:$0xff]
    %v145 = vld [vmem:[%s3 + $0x10] sm:$0xff]
    %v146 = vld [vmem:[%s3 + $0x18] sm:$0xff]
    %v147 = vld [vmem:[%s4] sm:$0x1]
    %v149 = vlaneseq
    %v150 = vshrl.u32 %v149, 7
    %v151 = vsub.s32 0, %v150
    %v152 = vrot.slane %v147, %v151
    %vm154 = vcmask 261120
    %v156 = vsel %vm154, %v141, 0
    %v159 = vsel %vm154, %v142, 0
    %161 = vmatprep.subr.mxu0 0.0
    %162 = vmatpush1.msra.mxu0 %v143
    %163 = vmatprep.subr.mxu0 0.0
    %164 = vmatpush1.msra.mxu0 %v144
    %165 = vmatprep.subr.mxu0 0.0
    %166 = vmatpush1.msra.mxu0 %v145
    %167 = vmatprep.subr.mxu0 0.0
    %168 = vmatpush1.msra.mxu0 %v146
    %169 = vmatprep.subr.mxu0 0.0
    %170 = vmatpush1.msra.mxu0 0.0
    %171 = vmatprep.subr.mxu0 0.0
    %172 = vmatpush1.msra.mxu0 0.0
    %173 = vmatprep.subr.mxu0 0.0
    %174 = vmatpush1.msra.mxu0 0.0
    %175 = vmatprep.subr.mxu0 0.0
    %176 = vmatpush1.msra.mxu0 0.0
    %177 = vmatprep.subr.mxu0 0.0
    %178 = vmatpush1.msra.mxu0 0.0
    %179 = vmatprep.subr.mxu0 0.0
    %180 = vmatpush1.msra.mxu0 0.0
    %181 = vmatprep.subr.mxu0 0.0
    %182 = vmatpush1.msra.mxu0 0.0
    %183 = vmatprep.subr.mxu0 0.0
    %184 = vmatpush1.msra.mxu0 0.0
    %185 = vmatprep.subr.mxu0 0.0
    %186 = vmatpush1.msra.mxu0 0.0
    %187 = vmatprep.subr.mxu0 0.0
    %188 = vmatpush1.msra.mxu0 0.0
    %189 = vmatprep.subr.mxu0 0.0
    %190 = vmatpush1.msra.mxu0 0.0
    %191 = vmatprep.subr.mxu0 0.0
    %192 = vmatpush1.msra.mxu0 0.0
    %193 = vmatprep.subr.mxu0 0.0
    %194 = vmatpush1.msra.mxu0 0.0
    %195 = vmatprep.subr.mxu0 0.0
    %196 = vmatpush1.msra.mxu0 0.0
    %197 = vmatprep.subr.mxu0 0.0
    %198 = vmatpush1.msra.mxu0 0.0
    %199 = vmatprep.subr.mxu0 0.0
    %200 = vmatpush1.msra.mxu0 0.0
    %201 = vmatprep.subr.mxu0 0.0
    %202 = vmatpush1.msra.mxu0 0.0
    %203 = vmatprep.subr.mxu0 0.0
    %204 = vmatpush1.msra.mxu0 0.0
    %205 = vmatprep.subr.mxu0 0.0
    %206 = vmatpush1.msra.mxu0 0.0
    %207 = vmatprep.subr.mxu0 0.0
    %208 = vmatpush1.msra.mxu0 0.0
    %209 = vmatprep.subr.mxu0 0.0
    %210 = vmatpush1.msra.mxu0 0.0
    %211 = vmatprep.subr.mxu0 0.0
    %212 = vmatpush1.msra.mxu0 0.0
    %213 = vmatprep.subr.mxu0 0.0
    %214 = vmatpush1.msra.mxu0 0.0
    %215 = vmatprep.subr.mxu0 0.0
    %216 = vmatpush1.msra.mxu0 0.0
    %217 = vmatprep.subr.mxu0 0.0
    %218 = vmatpush1.msra.mxu0 0.0
    %219 = vmatprep.subr.mxu0 0.0
    %220 = vmatpush1.msra.mxu0 0.0
    %221 = vmatprep.subr.mxu0 0.0
    %222 = vmatpush1.msra.mxu0 0.0
    %223 = vmatprep.subr.mxu0 0.0
    %224 = vmatpush1.msra.mxu0 0.0
    %225 = vmatprep.mubr.f32.mxu0 0.0
    %226 = vmatmul.mubr.f32.gmra.mrb[0].mxu0 %v156
    %v227 = vpop.f32.mrb[0].mxu0
    %v228 = vadd.f32 %v152, %v227
    %v229 = vpop.f32.mrb[0].mxu0
    %230 = vmatprep.mubr.f32.mxu0 0.0
    %231 = vmatmul.mubr.f32.gmra.mrb[0].mxu0 %v159
    %v232 = vpop.f32.mrb[0].mxu0
    %v233 = vadd.f32 %v152, %v232
    %v234 = vpop.f32.mrb[0].mxu0
    %235 = vdwg.mxu0
    %v236 = vmax.f32 %v228, 0.0
    %v237 = vmax.f32 %v233, 0.0
    %v238 = vld [vmem:[%s5] sm:$0xf]
    %v239 = vld [vmem:[%s6] sm:$0x1]
    %v241 = vlaneseq
    %v242 = vshrl.u32 %v241, 7
    %v243 = vsub.s32 0, %v242
    %v244 = vrot.slane %v239, %v243
    %vm246 = vcmask 31744
    %v248 = vsel %vm246, %v236, 0
    %v251 = vsel %vm246, %v237, 0
    %v254 = vsel %vm62, %v238, 0
    %256 = vmatprep.subr.mxu0 0.0
    %257 = vmatpush1.msra.mxu0 %v254
    %258 = vmatprep.subr.mxu0 0.0
    %259 = vmatpush1.msra.mxu0 0.0
    %260 = vmatprep.subr.mxu0 0.0
    %261 = vmatpush1.msra.mxu0 0.0
    %262 = vmatprep.subr.mxu0 0.0
    %263 = vmatpush1.msra.mxu0 0.0
    %264 = vmatprep.subr.mxu0 0.0
    %265 = vmatpush1.msra.mxu0 0.0
    %266 = vmatprep.subr.mxu0 0.0
    %267 = vmatpush1.msra.mxu0 0.0
    %268 = vmatprep.subr.mxu0 0.0
    %269 = vmatpush1.msra.mxu0 0.0
    %270 = vmatprep.subr.mxu0 0.0
    %271 = vmatpush1.msra.mxu0 0.0
    %272 = vmatprep.subr.mxu0 0.0
    %273 = vmatpush1.msra.mxu0 0.0
    %274 = vmatprep.subr.mxu0 0.0
    %275 = vmatpush1.msra.mxu0 0.0
    %276 = vmatprep.subr.mxu0 0.0
    %277 = vmatpush1.msra.mxu0 0.0
    %278 = vmatprep.subr.mxu0 0.0
    %279 = vmatpush1.msra.mxu0 0.0
    %280 = vmatprep.subr.mxu0 0.0
    %281 = vmatpush1.msra.mxu0 0.0
    %282 = vmatprep.subr.mxu0 0.0
    %283 = vmatpush1.msra.mxu0 0.0
    %284 = vmatprep.subr.mxu0 0.0
    %285 = vmatpush1.msra.mxu0 0.0
    %286 = vmatprep.subr.mxu0 0.0
    %287 = vmatpush1.msra.mxu0 0.0
    %288 = vmatprep.subr.mxu0 0.0
    %289 = vmatpush1.msra.mxu0 0.0
    %290 = vmatprep.subr.mxu0 0.0
    %291 = vmatpush1.msra.mxu0 0.0
    %292 = vmatprep.subr.mxu0 0.0
    %293 = vmatpush1.msra.mxu0 0.0
    %294 = vmatprep.subr.mxu0 0.0
    %295 = vmatpush1.msra.mxu0 0.0
    %296 = vmatprep.subr.mxu0 0.0
    %297 = vmatpush1.msra.mxu0 0.0
    %298 = vmatprep.subr.mxu0 0.0
    %299 = vmatpush1.msra.mxu0 0.0
    %300 = vmatprep.subr.mxu0 0.0
    %301 = vmatpush1.msra.mxu0 0.0
    %302 = vmatprep.subr.mxu0 0.0
    %303 = vmatpush1.msra.mxu0 0.0
    %304 = vmatprep.subr.mxu0 0.0
    %305 = vmatpush1.msra.mxu0 0.0
    %306 = vmatprep.subr.mxu0 0.0
    %307 = vmatpush1.msra.mxu0 0.0
    %308 = vmatprep.subr.mxu0 0.0
    %309 = vmatpush1.msra.mxu0 0.0
    %310 = vmatprep.subr.mxu0 0.0
    %311 = vmatpush1.msra.mxu0 0.0
    %312 = vmatprep.subr.mxu0 0.0
    %313 = vmatpush1.msra.mxu0 0.0
    %314 = vmatprep.subr.mxu0 0.0
    %315 = vmatpush1.msra.mxu0 0.0
    %316 = vmatprep.subr.mxu0 0.0
    %317 = vmatpush1.msra.mxu0 0.0
    %318 = vmatprep.subr.mxu0 0.0
    %319 = vmatpush1.msra.mxu0 0.0
    %320 = vmatprep.mubr.f32.mxu0 0.0
    %321 = vmatmul.mubr.f32.gmra.mrb[0].mxu0 %v248
    %v322 = vpop.f32.mrb[0].mxu0
    %v323 = vadd.f32 %v244, %v322
    %v324 = vpop.f32.mrb[0].mxu0
    %325 = vmatprep.mubr.f32.mxu0 0.0
    %326 = vmatmul.mubr.f32.gmra.mrb[0].mxu0 %v251
    %v327 = vpop.f32.mrb[0].mxu0
    %v328 = vadd.f32 %v244, %v327
    %v329 = vpop.f32.mrb[0].mxu0
    %330 = vdwg.mxu0
    %v331 = vmax.f32 %v323, 0.0
    %v332 = vmax.f32 %v328, 0.0
    %v333 = vld [vmem:[%s7] sm:$0xff]
    %v334 = vld [vmem:[%s7 + $0x8] sm:$0xff]
    %v335 = vld [vmem:[%s7 + $0x10] sm:$0xff]
    %v336 = vld [vmem:[%s7 + $0x18] sm:$0xff]
    %v337 = vld [vmem:[%s8] sm:$0x1]
    %v339 = vlaneseq
    %v340 = vshrl.u32 %v339, 7
    %v341 = vsub.s32 0, %v340
    %v342 = vrot.slane %v337, %v341
    %v345 = vsel %vm154, %v331, 0
    %v348 = vsel %vm154, %v332, 0
    %350 = vmatprep.subr.mxu0 0.0
    %351 = vmatpush1.msra.mxu0 %v333
    %352 = vmatprep.subr.mxu0 0.0
    %353 = vmatpush1.msra.mxu0 %v334
    %354 = vmatprep.subr.mxu0 0.0
    %355 = vmatpush1.msra.mxu0 %v335
    %356 = vmatprep.subr.mxu0 0.0
    %357 = vmatpush1.msra.mxu0 %v336
    %358 = vmatprep.subr.mxu0 0.0
    %359 = vmatpush1.msra.mxu0 0.0
    %360 = vmatprep.subr.mxu0 0.0
    %361 = vmatpush1.msra.mxu0 0.0
    %362 = vmatprep.subr.mxu0 0.0
    %363 = vmatpush1.msra.mxu0 0.0
    %364 = vmatprep.subr.mxu0 0.0
    %365 = vmatpush1.msra.mxu0 0.0
    %366 = vmatprep.subr.mxu0 0.0
    %367 = vmatpush1.msra.mxu0 0.0
    %368 = vmatprep.subr.mxu0 0.0
    %369 = vmatpush1.msra.mxu0 0.0
    %370 = vmatprep.subr.mxu0 0.0
    %371 = vmatpush1.msra.mxu0 0.0
    %372 = vmatprep.subr.mxu0 0.0
    %373 = vmatpush1.msra.mxu0 0.0
    %374 = vmatprep.subr.mxu0 0.0
    %375 = vmatpush1.msra.mxu0 0.0
    %376 = vmatprep.subr.mxu0 0.0
    %377 = vmatpush1.msra.mxu0 0.0
    %378 = vmatprep.subr.mxu0 0.0
    %379 = vmatpush1.msra.mxu0 0.0
    %380 = vmatprep.subr.mxu0 0.0
    %381 = vmatpush1.msra.mxu0 0.0
    %382 = vmatprep.subr.mxu0 0.0
    %383 = vmatpush1.msra.mxu0 0.0
    %384 = vmatprep.subr.mxu0 0.0
    %385 = vmatpush1.msra.mxu0 0.0
    %386 = vmatprep.subr.mxu0 0.0
    %387 = vmatpush1.msra.mxu0 0.0
    %388 = vmatprep.subr.mxu0 0.0
    %389 = vmatpush1.msra.mxu0 0.0
    %390 = vmatprep.subr.mxu0 0.0
    %391 = vmatpush1.msra.mxu0 0.0
    %392 = vmatprep.subr.mxu0 0.0
    %393 = vmatpush1.msra.mxu0 0.0
    %394 = vmatprep.subr.mxu0 0.0
    %395 = vmatpush1.msra.mxu0 0.0
    %396 = vmatprep.subr.mxu0 0.0
    %397 = vmatpush1.msra.mxu0 0.0
    %398 = vmatprep.subr.mxu0 0.0
    %399 = vmatpush1.msra.mxu0 0.0
    %400 = vmatprep.subr.mxu0 0.0
    %401 = vmatpush1.msra.mxu0 0.0
    %402 = vmatprep.subr.mxu0 0.0
    %403 = vmatpush1.msra.mxu0 0.0
    %404 = vmatprep.subr.mxu0 0.0
    %405 = vmatpush1.msra.mxu0 0.0
    %406 = vmatprep.subr.mxu0 0.0
    %407 = vmatpush1.msra.mxu0 0.0
    %408 = vmatprep.subr.mxu0 0.0
    %409 = vmatpush1.msra.mxu0 0.0
    %410 = vmatprep.subr.mxu0 0.0
    %411 = vmatpush1.msra.mxu0 0.0
    %412 = vmatprep.subr.mxu0 0.0
    %413 = vmatpush1.msra.mxu0 0.0
    %414 = vmatprep.mubr.f32.mxu0 0.0
    %415 = vmatmul.mubr.f32.gmra.mrb[0].mxu0 %v345
    %v416 = vpop.f32.mrb[0].mxu0
    %v417 = vadd.f32 %v342, %v416
    %v418 = vpop.f32.mrb[0].mxu0
    %419 = vmatprep.mubr.f32.mxu0 0.0
    %420 = vmatmul.mubr.f32.gmra.mrb[0].mxu0 %v348
    %v421 = vpop.f32.mrb[0].mxu0
    %v422 = vadd.f32 %v342, %v421
    %v423 = vpop.f32.mrb[0].mxu0
    %424 = vdwg.mxu0
    %425 = vst.msk [vmem:[#allocation2] sm:$0xff] %vm55, %v417
    %426 = vst.msk [vmem:[#allocation2 + $0x8] sm:$0xff] %vm55, %v422
    // Predicated region
    $region38: #{tpu_custom_call.1} parent=1 // pred_check
      _
    $region39: #{tpu_custom_call.1} parent=1 // pred_check_branch
      %428 = sbr.rel (0) target = $region41
    $region40: #{tpu_custom_call.1} parent=1 // pred_region
      %s430 = ssub.s32 256, 256
      %431 = vsyncadd [#allocation3], %s430
      %s432 = sshll.u32 [#allocation2], 4
      %s433 = int_to_ptr.vmem [resolvable:$true] %s432
      %438 = dma.vmem_to_hbm [thread:$0]  %s433, 256, %s9, [#allocation3], 128, 128, 8
    $region41: #{tpu_custom_call.1} parent=1 // pred_fallthru
      _
    // Predicated region
    $region42: #{tpu_custom_call.1} parent=1 // pred_check
      _
    $region43: #{tpu_custom_call.1} parent=1 // pred_check_branch
      %440 = sbr.rel (0) target = $region45
    $region44: #{tpu_custom_call.1} parent=1 // pred_region
      %441 = dma.done [#allocation3], 256
    $region45: #{tpu_custom_call.1} parent=1 // pred_fallthru
      _
    %442 = vsyncpa [#allocation3], 1

</llo_original>
